<compile_context>
chip_gen: v5e
topology: v5e:2x2
jax: 0.10.0
libtpu: 0.0.40
codegen_flags: <defaults>
</compile_context>

<pallas_src>
import jax
import jax.numpy as jnp
from jax.experimental import pallas as pl
from jax.experimental.pallas import tpu as pltpu


def _mask_cid_kernel(x_ref, masked_ref, idx_ref):
    # x_ref: (TB, C, D) float32 tile of the input.
    x = x_ref[...].astype(jnp.float32)

    # Squared L2 norm per capsule vector. argmax(||v||) == argmax(||v||^2), so
    # the sqrt is skipped. (Only breaks if |x| ~ 1e19 overflows f32 when
    # squared -- far beyond any capsule activation.)
    sq = jnp.sum(x * x, axis=2)                                  # (TB, C)

    # argmax over the class axis, first occurrence on ties (matches torch.max).
    C = sq.shape[1]
    col = jax.lax.broadcasted_iota(jnp.int32, sq.shape, 1)       # (TB, C)
    maxval = jnp.max(sq, axis=1, keepdims=True)                  # (TB, 1)
    cand = jnp.where(sq == maxval, col, jnp.int32(C))
    idx = jnp.min(cand, axis=1, keepdims=True)                   # (TB, 1) int32

    # Gather the winning capsule via select + reduce (no one-hot multiply,
    # no MXU -- stays on the VPU under the input DMA).
    sel = col[:, :, None] == idx[:, :, None]                     # (TB, C, 1)
    masked = jnp.sum(jnp.where(sel, x, 0.0), axis=1)             # (TB, D)

    masked_ref[...] = masked.astype(masked_ref.dtype)
    idx_ref[...] = idx


def _pick_batch_tile(B, C, D, max_batch_tile):
    # Size the batch tile against the lane/sublane-padded VMEM footprint.
    c_pad = ((C + 7) // 8) * 8
    d_pad = ((D + 127) // 128) * 128
    row_bytes = c_pad * d_pad * 4                 # padded f32 bytes per batch row
    budget = 8 * 1024 * 1024                      # 2x-buffered input stays well inside scoped VMEM (v5e..v7x safe)
    tb = max(1, budget // (2 * row_bytes))
    tb = min(tb, max_batch_tile, B)
    if tb < B:
        # Tiled output blocks (TB, D) need a sublane-aligned leading dim.
        tb = max(8, (tb // 8) * 8)
    return tb


def mask_cid(x, target=None, *, max_batch_tile=1024):
    """x: (B, C, D, 1) float32. Returns (masked (B, 1, D) f32, indices (B,) i32)."""
    assert x.ndim == 4 and x.shape[-1] == 1
    B, C, D, _ = x.shape
    x3 = jnp.squeeze(x, axis=-1)                                 # (B, C, D)

    if target is not None:
        # TODO(synk): target branch is pure argmax+gather glue; done in plain JAX.
        idx = jnp.argmax(target, axis=1).astype(jnp.int32)
        masked = jnp.take_along_axis(x3, idx[:, None, None], axis=1)
        return masked.astype(jnp.float32), idx

    # NOTE: for tiny production B the per-grid-step + custom-call overhead of
    # Pallas exceeds the actual work; a dispatcher would fall back to plain JAX
    # below ~1k rows. Kept on the Pallas path here to exercise the kernel.
    tb = _pick_batch_tile(B, C, D, max_batch_tile)
    grid = (pl.cdiv(B, tb),)

    masked, idx = pl.pallas_call(
        _mask_cid_kernel,
        out_shape=(
            jax.ShapeDtypeStruct((B, D), jnp.float32),
            jax.ShapeDtypeStruct((B, 1), jnp.int32),
        ),
        grid_spec=pltpu.PrefetchScalarGridSpec(
            num_scalar_prefetch=0,
            grid=grid,
            in_specs=[pl.BlockSpec((tb, C, D), lambda i: (i, 0, 0))],
            out_specs=[
                pl.BlockSpec((tb, D), lambda i: (i, 0)),
                pl.BlockSpec((tb, 1), lambda i: (i, 0)),
            ],
        ),
        compiler_params=pltpu.CompilerParams(
            # Batch rows are independent -> megacore sharding on v7x.
            dimension_semantics=("parallel",),
        ),
        cost_estimate=pl.CostEstimate(
            flops=3 * B * C * D,
            transcendentals=0,
            bytes_accessed=4 * (B * C * D + B * D + B),
        ),
    )(x3)

    return masked[:, None, :], jnp.squeeze(idx, axis=-1)


def _reference(x):
    x3 = jnp.squeeze(x, axis=-1)
    norms = jnp.linalg.norm(x3, axis=2)
    idx = jnp.argmax(norms, axis=1).astype(jnp.int32)
    masked = jnp.take_along_axis(x3, idx[:, None, None], axis=1)
    return masked, idx


if __name__ == "__main__":
    # Case 1: tile == full batch (single grid step).
    B, C, D = 2, 8, 16
    x = jax.random.normal(jax.random.PRNGKey(0), (B, C, D, 1), dtype=jnp.float32)
    masked, idx = mask_cid(x)
    masked = jax.block_until_ready(masked)
    idx = jax.block_until_ready(idx)
    ref_masked, ref_idx = _reference(x)
    assert masked.shape == (B, 1, D), masked.shape
    assert idx.shape == (B,), idx.shape
    assert jnp.all(idx == ref_idx), (idx, ref_idx)
    assert jnp.allclose(masked, ref_masked, atol=1e-6)

    # Case 2: batch tiled over the grid (3 steps, parallel semantics).
    B2, C2, D2 = 24, 10, 16
    x2 = jax.random.normal(jax.random.PRNGKey(1), (B2, C2, D2, 1), dtype=jnp.float32)
    masked2, idx2 = mask_cid(x2, max_batch_tile=8)
    masked2 = jax.block_until_ready(masked2)
    idx2 = jax.block_until_ready(idx2)
    ref_masked2, ref_idx2 = _reference(x2)
    assert masked2.shape == (B2, 1, D2), masked2.shape
    assert idx2.shape == (B2,), idx2.shape
    assert jnp.all(idx2 == ref_idx2), (idx2, ref_idx2)
    assert jnp.allclose(masked2, ref_masked2, atol=1e-6)

    print("KERNEL_OK")
</pallas_src>

<mosaic_0001>
module attributes {stable_mosaic.version = 11 : i64} {
  func.func @_mask_cid_kernel(%arg0: i32, %arg1: memref<2x8x16xf32, #tpu.memory_space<vmem>>, %arg2: memref<2x16xf32, #tpu.memory_space<vmem>>, %arg3: memref<2x1xi32, #tpu.memory_space<vmem>>) attributes {dimension_semantics = [#tpu.dimension_semantics<parallel>], iteration_bounds = array<i64: 1>, scalar_prefetch = 0 : i64, scratch_operands = 0 : i64, tpu.core_type = #tpu.core_type<tc>, window_params = [{transform_indices = @transform_0, window_bounds = array<i64: 2, 8, 16>}, {transform_indices = @transform_1, window_bounds = array<i64: 2, 16>}, {transform_indices = @transform_2, window_bounds = array<i64: 2, 1>}]} {
    %c0 = arith.constant 0 : index
    %c0_0 = arith.constant 0 : index
    %c0_1 = arith.constant 0 : index
    %0 = vector.load %arg1[%c0, %c0_0, %c0_1] : memref<2x8x16xf32, #tpu.memory_space<vmem>>, vector<2x8x16xf32>
    %1 = arith.mulf %0, %0 : vector<2x8x16xf32>
    %cst = arith.constant dense<0.000000e+00> : vector<2x8xf32>
    %2 = vector.multi_reduction <add>, %1, %cst [2] : vector<2x8x16xf32> to vector<2x8xf32>
    %3 = tpu.iota {dimensions = array<i32: 1>} : vector<2x8xi32>
    %cst_2 = arith.constant dense<0xFF800000> : vector<2xf32>
    %4 = vector.multi_reduction <maximumf>, %2, %cst_2 [1] : vector<2x8xf32> to vector<2xf32>
    %5 = vector.shape_cast %4 : vector<2xf32> to vector<2x1xf32>
    %6 = vector.broadcast %5 : vector<2x1xf32> to vector<2x8xf32>
    %7 = arith.cmpf oeq, %2, %6 : vector<2x8xf32>
    %c8_i32 = arith.constant 8 : i32
    %8 = vector.broadcast %c8_i32 : i32 to vector<2x8xi32>
    %9 = arith.select %7, %3, %8 : vector<2x8xi1>, vector<2x8xi32>
    %cst_3 = arith.constant dense<2147483647> : vector<2xi32>
    %10 = vector.multi_reduction <minsi>, %9, %cst_3 [1] : vector<2x8xi32> to vector<2xi32>
    %11 = vector.shape_cast %10 : vector<2xi32> to vector<2x1xi32>
    %12 = vector.shape_cast %3 : vector<2x8xi32> to vector<2x8x1xi32>
    %13 = vector.shape_cast %11 : vector<2x1xi32> to vector<2x1x1xi32>
    %14 = vector.broadcast %13 : vector<2x1x1xi32> to vector<2x8x1xi32>
    %15 = arith.cmpi eq, %12, %14 : vector<2x8x1xi32>
    %cst_4 = arith.constant 0.000000e+00 : f32
    %16 = vector.shape_cast %15 : vector<2x8x1xi1> to vector<2x8x1xi1>
    %17 = vector.broadcast %16 : vector<2x8x1xi1> to vector<2x8x16xi1>
    %18 = vector.broadcast %cst_4 : f32 to vector<2x8x16xf32>
    %19 = arith.select %17, %0, %18 : vector<2x8x16xi1>, vector<2x8x16xf32>
    %cst_5 = arith.constant dense<0.000000e+00> : vector<2x16xf32>
    %20 = vector.multi_reduction <add>, %19, %cst_5 [1] : vector<2x8x16xf32> to vector<2x16xf32>
    %c0_6 = arith.constant 0 : index
    %c0_7 = arith.constant 0 : index
    %21 = vector.load %arg2[%c0_6, %c0_7] : memref<2x16xf32, #tpu.memory_space<vmem>>, vector<2x16xf32>
    tpu.vector_store %arg2[%c0_6, %c0_7], %20 {strides = array<i32>} : memref<2x16xf32, #tpu.memory_space<vmem>>, vector<2x16xf32>,
    %c0_8 = arith.constant 0 : index
    %c0_9 = arith.constant 0 : index
    %22 = vector.load %arg3[%c0_8, %c0_9] : memref<2x1xi32, #tpu.memory_space<vmem>>, vector<2x1xi32>
    tpu.vector_store %arg3[%c0_8, %c0_9], %11 {strides = array<i32>} : memref<2x1xi32, #tpu.memory_space<vmem>>, vector<2x1xi32>,
    return
  }
  func.func @transform_0(%arg0: i32) -> (i32, i32, i32) {
    %c0_i32 = arith.constant 0 : i32
    %c0_i32_0 = arith.constant 0 : i32
    %c0_i32_1 = arith.constant 0 : i32
    return %arg0, %c0_i32, %c0_i32_0 : i32, i32, i32
  }
  func.func @transform_1(%arg0: i32) -> (i32, i32) {
    %c0_i32 = arith.constant 0 : i32
    %c0_i32_0 = arith.constant 0 : i32
    return %arg0, %c0_i32 : i32, i32
  }
  func.func @transform_2(%arg0: i32) -> (i32, i32) {
    %c0_i32 = arith.constant 0 : i32
    %c0_i32_0 = arith.constant 0 : i32
    return %arg0, %c0_i32 : i32, i32
  }
}

</mosaic_0001>

<llo_original>
// kernel: tpu_custom_call.1
$region0: #{tpu_custom_call.1}
  #allocation0 [shape = 'u32[]', space=smem, size = 0x4, offset = 0x4, fixed_abs, tag = 'smem constant byte address 0x4 - core index']
  #allocation1 [shape = 'u32[72,128]{1,0:T(1,128)}', space=vmem, size = 0x9000, scoped, tag = 'internal scratch']
  %s0 = inlined_call_operand.hbm [shape: f32[2,8,16], index: 0, kind: input, shape index: {}]
  %s1 = inlined_call_operand.hbm [shape: f32[2,16], index: 1, kind: output, shape index: {0}]
  %s2 = inlined_call_operand.vmem [shape: s32[2,1], index: 2, kind: output, shape index: {1}]
  %3 = xla_tuple %s1, %s2
  %s4 = sld [smem:[#allocation0]]
  $region26: #{tpu_custom_call.1} parent=0
    _
  %s6 = ssub.s32 1, %s4
  %s7 = scalar_select 0, %s6, %s4
  $region1: #{tpu_custom_call.1} parent=0
    #allocation2 [shape = 'u8[8192]{0}', space=vmem, size = 0x2000, scoped, tag = 'input window, operand 0, single buffered']
    #allocation3 [shape = 's32[1]{0}', space=sflag, size = 0x4, scoped, tag = 'scoped memory for tpu_custom_call.1']
    #allocation4 [shape = 's32[1]{0}', space=sflag, size = 0x4, scoped, tag = 'scoped memory for tpu_custom_call.1']
    #allocation5 [shape = 'u8[1024]{0}', space=vmem, size = 0x400, scoped, tag = 'output window, operand 0, single buffered']
    %8 = vsyncpa [#allocation3], 0
    %9 = vsyncpa [#allocation4], 0
    // Predicated region
    $region2: #{tpu_custom_call.1} parent=1 // pred_check
      _
    $region3: #{tpu_custom_call.1} parent=1 // pred_check_branch
      %11 = sbr.rel (0) target = $region5
    $region4: #{tpu_custom_call.1} parent=1 // pred_region
      %13 = vsyncadd [#allocation3], 0
      %s14 = sshll.u32 %s0, 4
      %s15 = int_to_ptr.hbm [resolvable:$true] %s14
      %s16 = sshll.u32 [#allocation2], 4
      %s17 = int_to_ptr.vmem [resolvable:$true] %s16
      %22 = dma.hbm_to_vmem [thread:$0]  %s15, 256, %s17, [#allocation3], 128, 128, 8
    $region5: #{tpu_custom_call.1} parent=1 // pred_fallthru
      _
    // Predicated region
    $region6: #{tpu_custom_call.1} parent=1 // pred_check
      _
    $region7: #{tpu_custom_call.1} parent=1 // pred_check_branch
      %24 = sbr.rel (0) target = $region9
    $region8: #{tpu_custom_call.1} parent=1 // pred_region
      %26 = dma.done [#allocation3], 256
    $region9: #{tpu_custom_call.1} parent=1 // pred_fallthru
      _
    %v27 = vld [vmem:[#allocation2] sm:$0xff]
    %v28 = vld [vmem:[#allocation2 + $0x8] sm:$0xff]
    %v29 = vmul.f32 %v27, %v27
    %v30 = vmul.f32 %v28, %v28
    %vm31 = vcmask 130048
    %v32 = vsel %vm31, %v29, 0.0
    %33 = vadd.xlane.f32.xlu0 %v32
    %v34 = vpop.xlane.xlu0 %33
    %v35 = vsel %vm31, %v30, 0.0
    %36 = vadd.xlane.f32.xlu0 %v35
    %v37 = vpop.xlane.xlu0 %36
    %v38 = vlaneseq
    %v39 = vand.u32 %v38, 127
    %v42 = vperm.slane %v34, %v39
    %v43 = vperm.slane %v37, %v39
    %vm44 = vcmask 1041409
    %v45 = vsel %vm44, %v43, %v42
    %vm47 = vcmask 58368
    %v48 = vsel %vm47, %v45, -inf
    %49 = vmax.xlane.f32.xlu0 %v48
    %v50 = vpop.xlane.xlu0 %49
    %v52 = vperm.slane %v50, 0
    %v53 = vperm.slane %v50, 1
    %vm56 = vcmp.eq.f32.partialorder %v34, %v52
    %vm57 = vcmp.eq.f32.partialorder %v37, %v53
    %v58 = vlaneseq
    %v59 = vshrl.u32 %v58, 7
    %61 = vset.pattern.permute.xlu0 %v59
    %62 = vperm.xlu0 %61, %v39
    %v63 = vpop.permute.xlu0 %62
    %v64 = vsel %vm56, %v63, 8
    %v65 = vsel %vm57, %v63, 8
    %66 = vset.pattern.permute.xlu0 0
    %67 = vperm.xlu0 %66, %v64
    %v68 = vpop.permute.xlu0 %67
    %69 = vset.pattern.permute.xlu0 0
    %70 = vperm.xlu0 %69, %v65
    %v71 = vpop.permute.xlu0 %70
    %v72 = vperm.slane %v68, %v39
    %v73 = vperm.slane %v71, %v39
    %v74 = vsel %vm44, %v73, %v72
    %v75 = vsel %vm47, %v74, 2147483647
    %v76 = vand.u32 %v75, 65535
    %v77 = vshra.s32 %v75, 16
    %v78 = vcvt.s32.f32 %v76
    %v79 = vcvt.s32.f32 %v77
    %80 = vmin.xlane.f32.xlu0 %v79
    %v81 = vpop.xlane.xlu0 %80
    %vm82 = vcmp.eq.f32.partialorder %v79, %v81
    %v83 = vsel %vm82, %v78, inf
    %84 = vmin.xlane.f32.xlu0 %v83
    %v85 = vpop.xlane.xlu0 %84
    %v86 = vcvt.f32.s32 %v85
    %v87 = vcvt.f32.s32 %v81
    %v88 = vshll.u32 %v87, 16
    %v89 = vadd.s32 %v88, %v86
    %v90 = vperm.slane %v89, 0
    %v91 = vperm.slane %v89, 1
    %vm92 = vcmp.eq.s32.totalorder %v63, %v90
    %vm93 = vcmp.eq.s32.totalorder %v63, %v91
    %v94 = vsel %vm92, 1, 0
    %v95 = vsel %vm93, 1, 0
    %vm96 = vcmp.eq.s32.totalorder %v94, 1
    %vm97 = vcmp.eq.s32.totalorder %v95, 1
    %v98 = vsel %vm96, %v27, 0.0
    %v99 = vsel %vm97, %v28, 0.0
    %v100 = vsel %vm31, %v98, 0.0
    %v101 = vrot.slane %v100, 4
    %v102 = vadd.f32 %v100, %v101
    %v103 = vrot.slane %v102, 2
    %v104 = vadd.f32 %v102, %v103
    %v105 = vrot.slane %v104, 1
    %v106 = vadd.f32 %v104, %v105
    %v107 = vsel %vm31, %v99, 0.0
    %v108 = vrot.slane %v107, 4
    %v109 = vadd.f32 %v107, %v108
    %v110 = vrot.slane %v109, 2
    %v111 = vadd.f32 %v109, %v110
    %v112 = vrot.slane %v111, 1
    %v113 = vadd.f32 %v111, %v112
    %v116 = vsel %vm44, %v113, %v106
    %vm118 = vcmask 123904
    %119 = vst.msk [vmem:[#allocation5] sm:$0x3] %vm118, %v116
    %vm120 = vcmask 1024
    %121 = vst.msk [vmem:[%s2] sm:$0x3] %vm120, %v89
    // Predicated region
    $region10: #{tpu_custom_call.1} parent=1 // pred_check
      _
    $region11: #{tpu_custom_call.1} parent=1 // pred_check_branch
      %123 = sbr.rel (0) target = $region13
    $region12: #{tpu_custom_call.1} parent=1 // pred_region
      %125 = vsyncadd [#allocation4], 0
      %s127 = sshll.u32 [#allocation5], 4
      %s128 = int_to_ptr.vmem [resolvable:$true] %s127
      %s129 = sshll.u32 %s1, 4
      %s130 = int_to_ptr.hbm [resolvable:$true] %s129
      %132 = dma.vmem_to_hbm [thread:$0]  %s128, 32, %s130, [#allocation4]
    $region13: #{tpu_custom_call.1} parent=1 // pred_fallthru
      _
    // Predicated region
    $region14: #{tpu_custom_call.1} parent=1 // pred_check
      _
    $region15: #{tpu_custom_call.1} parent=1 // pred_check_branch
      %134 = sbr.rel (0) target = $region17
    $region16: #{tpu_custom_call.1} parent=1 // pred_region
      _
    $region17: #{tpu_custom_call.1} parent=1 // pred_fallthru
      _
    // Predicated region
    $region18: #{tpu_custom_call.1} parent=1 // pred_check
      _
    $region19: #{tpu_custom_call.1} parent=1 // pred_check_branch
      %136 = sbr.rel (0) target = $region21
    $region20: #{tpu_custom_call.1} parent=1 // pred_region
      %138 = dma.done [#allocation4], 32
    $region21: #{tpu_custom_call.1} parent=1 // pred_fallthru
      _
    // Predicated region
    $region22: #{tpu_custom_call.1} parent=1 // pred_check
      _
    $region23: #{tpu_custom_call.1} parent=1 // pred_check_branch
      %140 = sbr.rel (0) target = $region25
    $region24: #{tpu_custom_call.1} parent=1 // pred_region
      _
    $region25: #{tpu_custom_call.1} parent=1 // pred_fallthru
      _
    %141 = vsyncpa [#allocation3], 1
    %142 = vsyncpa [#allocation4], 1

</llo_original>
